<compile_context>
chip_gen: v5e
topology: v5e:2x2
jax: 0.10.0
libtpu: 0.0.40
codegen_flags: <defaults>
</compile_context>

<pallas_src>
import jax
import jax.numpy as jnp
from jax.experimental import pallas as pl
from jax.experimental.pallas import tpu as pltpu


# ---------------------------------------------------------------------------
# Fused ConvTranspose3d(Cin->Cout, k=2, stride=1, padding=0) + bias + leaky.
# Grid = (N, Do, Ho): each step accumulates all contributing kernel taps for one
# output row (Wo, Cout) in VMEM and writes that row to HBM once.
# ---------------------------------------------------------------------------
def conv_transpose3d_leaky(x, w, b, *, neg_scale=-0.08):
    N, Cin, D, H, W = x.shape
    Cin2, Cout, kD, kH, kW = w.shape
    assert Cin == Cin2 and (kD, kH, kW) == (2, 2, 2)
    Do, Ho, Wo = D + 1, H + 1, W + 1

    x_cl = jnp.transpose(x, (0, 2, 3, 4, 1)).astype(jnp.bfloat16)    # (N,D,H,W,Cin)
    w_t = jnp.transpose(w, (2, 3, 4, 0, 1)).astype(jnp.bfloat16)     # (2,2,2,Cin,Cout)
    b2 = b.reshape(1, Cout).astype(jnp.float32)

    def kernel(x00, x01, x10, x11, w_ref, b_ref, o_ref, acc_ref):
        do = pl.program_id(1)
        ho = pl.program_id(2)
        acc_ref[...] = jnp.zeros_like(acc_ref)

        def tap(x_ref, kd, kh):
            xr = x_ref[...]                                          # (W, Cin) bf16
            for kw in range(2):
                y = jnp.dot(xr, w_ref[kd, kh, kw],
                            preferred_element_type=jnp.float32)      # (W, Cout) f32
                acc_ref[kw:kw + W, :] += y

        # output voxel (do, ho, .) gets taps from input (do-kd, ho-kh, .)
        @pl.when(jnp.logical_and(do < D, ho < H))
        def _():
            tap(x00, 0, 0)

        @pl.when(jnp.logical_and(do < D, ho >= 1))
        def _():
            tap(x01, 0, 1)

        @pl.when(jnp.logical_and(do >= 1, ho < H))
        def _():
            tap(x10, 1, 0)

        @pl.when(jnp.logical_and(do >= 1, ho >= 1))
        def _():
            tap(x11, 1, 1)

        # fused epilogue: bias + where(x1 > 0, x1, x1 * -0.08)
        v = acc_ref[...] + b_ref[...]
        o_ref[...] = jnp.where(v > 0, v, v * neg_scale)

    row_block = (None, None, None, W, Cin)

    def rmap(dd, dh):
        def index_map(n, do, ho):
            d = jnp.clip(do - dd, 0, D - 1)
            h = jnp.clip(ho - dh, 0, H - 1)
            return (n, d, h, 0, 0)
        return index_map

    out = pl.pallas_call(
        kernel,
        out_shape=jax.ShapeDtypeStruct((N, Do, Ho, Wo, Cout), jnp.float32),
        grid=(N, Do, Ho),
        in_specs=[
            pl.BlockSpec(row_block, rmap(0, 0)),
            pl.BlockSpec(row_block, rmap(0, 1)),
            pl.BlockSpec(row_block, rmap(1, 0)),
            pl.BlockSpec(row_block, rmap(1, 1)),
            pl.BlockSpec((kD, kH, kW, Cin, Cout), lambda n, do, ho: (0, 0, 0, 0, 0)),
            pl.BlockSpec((1, Cout), lambda n, do, ho: (0, 0)),
        ],
        out_specs=pl.BlockSpec((None, None, None, Wo, Cout),
                               lambda n, do, ho: (n, do, ho, 0, 0)),
        scratch_shapes=[pltpu.VMEM((Wo, Cout), jnp.float32)],
        compiler_params=pltpu.CompilerParams(
            dimension_semantics=("parallel", "parallel", "parallel")),
    )(x_cl, x_cl, x_cl, x_cl, w_t, b2)

    return jnp.transpose(out, (0, 4, 1, 2, 3))                        # NCDHW


# ---------------------------------------------------------------------------
# Fused ConvTranspose2d(Cin->Cout, k=4, stride=2, padding=1, bias=False).
# Grid = (N, H): each step produces output rows {2m, 2m+1} in output-parity
# layout (4, W, Cout), accumulating all taps in VMEM; the parity interleave is a
# single reshape in the wrapper.
# ---------------------------------------------------------------------------
def conv_transpose2d_s2p1(x, w):
    N, Cin, H, W = x.shape
    Cin2, Cout, kH, kW = w.shape
    assert Cin == Cin2 and (kH, kW) == (4, 4)
    Ho, Wo = 2 * H, 2 * W

    x_cl = jnp.transpose(x, (0, 2, 3, 1)).astype(jnp.bfloat16)        # (N,H,W,Cin)
    w_t = jnp.transpose(w, (2, 3, 0, 1)).astype(jnp.bfloat16)         # (4,4,Cin,Cout)

    def kernel(xp_ref, xc_ref, xn_ref, w_ref, o_ref, acc_ref):
        m = pl.program_id(1)
        acc_ref[...] = jnp.zeros_like(acc_ref)

        def add_row(x_row, kh, pr):
            # x_row: (W, Cin);  ho = 2i - 1 + kh, wo = 2j - 1 + kw
            ys = [jnp.dot(x_row, w_ref[kh, kw],
                          preferred_element_type=jnp.float32)         # (W, Cout)
                  for kw in range(4)]
            acc_ref[2 * pr + 0, :, :] += ys[1]              # wo = 2j      (even)
            acc_ref[2 * pr + 1, :, :] += ys[2]              # wo = 2j + 1  (odd)
            acc_ref[2 * pr + 0, 1:, :] += ys[3][:-1, :]     # wo = 2(j+1)  (even)
            acc_ref[2 * pr + 1, :-1, :] += ys[0][1:, :]     # wo = 2(j-1)+1 (odd)

        xc = xc_ref[...]
        add_row(xc, 1, 0)          # output row 2m     <- input row m,   kh=1
        add_row(xc, 2, 1)          # output row 2m + 1 <- input row m,   kh=2

        @pl.when(m >= 1)
        def _():
            add_row(xp_ref[...], 3, 0)   # output row 2m     <- input row m-1, kh=3

        @pl.when(m < H - 1)
        def _():
            add_row(xn_ref[...], 0, 1)   # output row 2m + 1 <- input row m+1, kh=0

        o_ref[...] = acc_ref[...]

    row_block = (None, None, W, Cin)
    par = pl.pallas_call(
        kernel,
        out_shape=jax.ShapeDtypeStruct((N, H, 4, W, Cout), jnp.float32),
        grid=(N, H),
        in_specs=[
            pl.BlockSpec(row_block, lambda n, m: (n, jnp.maximum(m - 1, 0), 0, 0)),
            pl.BlockSpec(row_block, lambda n, m: (n, m, 0, 0)),
            pl.BlockSpec(row_block, lambda n, m: (n, jnp.minimum(m + 1, H - 1), 0, 0)),
            pl.BlockSpec((kH, kW, Cin, Cout), lambda n, m: (0, 0, 0, 0)),
        ],
        out_specs=pl.BlockSpec((None, None, 4, W, Cout),
                               lambda n, m: (n, m, 0, 0, 0)),
        scratch_shapes=[pltpu.VMEM((4, W, Cout), jnp.float32)],
        compiler_params=pltpu.CompilerParams(
            dimension_semantics=("parallel", "parallel")),
    )(x_cl, x_cl, x_cl, w_t)

    # (n, m, 2*pr+pc, w, c) -> (n, m, pr, w, pc, c) -> (N, Ho, Wo, Cout) -> NCHW
    out = par.reshape(N, H, 2, 2, W, Cout).transpose(0, 1, 2, 4, 3, 5)
    out = out.reshape(N, Ho, Wo, Cout)
    return jnp.transpose(out, (0, 3, 1, 2))


# ---------------------------------------------------------------------------
# Pure-JAX references (validation only).
# ---------------------------------------------------------------------------
def ref_conv_transpose3d_leaky(x, w, b, neg_scale=-0.08):
    N, Cin, D, H, W = x.shape
    _, Cout, kD, kH, kW = w.shape
    y = jnp.einsum('ncdhw,copqr->nodhwpqr', x, w,
                   precision=jax.lax.Precision.HIGHEST)
    out = jnp.zeros((N, Cout, D + kD - 1, H + kH - 1, W + kW - 1), jnp.float32)
    for kd in range(kD):
        for kh in range(kH):
            for kw in range(kW):
                out = out.at[:, :, kd:kd + D, kh:kh + H, kw:kw + W].add(
                    y[..., kd, kh, kw])
    out = out + b[None, :, None, None, None]
    return jnp.where(out > 0, out, out * neg_scale)


def _tap_slices(in_len, out_len, stride, k, padding):
    lo = 0
    while lo < in_len and lo * stride + k - padding < 0:
        lo += 1
    hi = in_len
    while hi > lo and (hi - 1) * stride + k - padding >= out_len:
        hi -= 1
    if hi <= lo:
        return None
    o0 = lo * stride + k - padding
    o1 = (hi - 1) * stride + k - padding + 1
    return slice(lo, hi), slice(o0, o1, stride)


def ref_conv_transpose2d(x, w, stride=2, padding=1):
    N, Cin, H, W = x.shape
    _, Cout, kH, kW = w.shape
    Ho = (H - 1) * stride - 2 * padding + kH
    Wo = (W - 1) * stride - 2 * padding + kW
    y = jnp.einsum('ncij,cokl->nijokl', x, w, precision=jax.lax.Precision.HIGHEST)
    out = jnp.zeros((N, Ho, Wo, Cout), jnp.float32)
    for kh in range(kH):
        sh = _tap_slices(H, Ho, stride, kh, padding)
        if sh is None:
            continue
        for kw in range(kW):
            sw = _tap_slices(W, Wo, stride, kw, padding)
            if sw is None:
                continue
            out = out.at[:, sh[1], sw[1], :].add(y[:, sh[0], sw[0], :, kh, kw])
    return jnp.transpose(out, (0, 3, 1, 2))


# ---------------------------------------------------------------------------
# Deterministic parameters mimicking the PyTorch module shapes.
# ---------------------------------------------------------------------------
def init_params(key):
    k1, k2, k3 = jax.random.split(key, 3)
    bound3 = 1.0 / (41 * 2 * 2 * 2) ** 0.5
    w3d = jax.random.uniform(k1, (14, 41, 2, 2, 2), jnp.float32, -bound3, bound3)
    b3d = jax.random.uniform(k2, (41,), jnp.float32, -bound3, bound3)
    bound2 = 1.0 / (427 * 4 * 4) ** 0.5
    w2d = jax.random.uniform(k3, (330, 427, 4, 4), jnp.float32, -bound2, bound2)
    return w3d, b3d, w2d


if __name__ == "__main__":
    key = jax.random.PRNGKey(0)
    kparam, kx3, kx2 = jax.random.split(key, 3)
    w3d, b3d, w2d = init_params(kparam)

    convt3d = jax.jit(conv_transpose3d_leaky)
    convt2d = jax.jit(conv_transpose2d_s2p1)

    # Small input consistent with the module's 5-D, 14-channel contract.
    x16 = jax.random.normal(kx3, (2, 14, 4, 6, 5), jnp.float32)

    # x1 = conv_t(x16); x4 = where(x1 > 0, x1, x1 * -0.08)  (epilogue fused)
    x4 = convt3d(x16, w3d, b3d)                              # (2, 41, 5, 7, 6)

    # TODO(synk): in the reference module, conv_t2(x4) is shape-invalid in PyTorch
    # itself (x4 is 5-D with 41 channels; ConvTranspose2d expects 4-D with 330
    # channels), so the composed forward cannot be reproduced.  The conv_t2 Pallas
    # kernel is exercised on a correctly-shaped standalone input instead.
    x2d = jax.random.normal(kx2, (2, 330, 6, 5), jnp.float32)
    out2 = convt2d(x2d, w2d)                                 # (2, 427, 12, 10)

    jax.block_until_ready((x4, out2))

    # --- correctness checks vs pure-JAX references on the same bf16-rounded
    #     inputs (f32 accumulation everywhere) ---
    xb = x16.astype(jnp.bfloat16).astype(jnp.float32)
    wb = w3d.astype(jnp.bfloat16).astype(jnp.float32)
    ref1 = ref_conv_transpose3d_leaky(xb, wb, b3d)
    assert x4.shape == (2, 41, 5, 7, 6)
    assert jnp.allclose(x4, ref1, atol=1e-3, rtol=1e-3), \
        float(jnp.max(jnp.abs(x4 - ref1)))

    x2b = x2d.astype(jnp.bfloat16).astype(jnp.float32)
    w2b = w2d.astype(jnp.bfloat16).astype(jnp.float32)
    ref2 = ref_conv_transpose2d(x2b, w2b, stride=2, padding=1)
    assert out2.shape == (2, 427, 12, 10)
    assert jnp.allclose(out2, ref2, atol=1e-3, rtol=1e-3), \
        float(jnp.max(jnp.abs(out2 - ref2)))

    print("KERNEL_OK")
</pallas_src>

<mosaic_0001>
module attributes {stable_mosaic.version = 11 : i64} {
  func.func @kernel(%arg0: i32, %arg1: i32, %arg2: i32, %arg3: memref<1x1x1x5x14xbf16, #tpu.memory_space<vmem>>, %arg4: memref<1x1x1x5x14xbf16, #tpu.memory_space<vmem>>, %arg5: memref<1x1x1x5x14xbf16, #tpu.memory_space<vmem>>, %arg6: memref<1x1x1x5x14xbf16, #tpu.memory_space<vmem>>, %arg7: memref<2x2x2x14x41xbf16, #tpu.memory_space<vmem>>, %arg8: memref<1x41xf32, #tpu.memory_space<vmem>>, %arg9: memref<1x1x1x6x41xf32, #tpu.memory_space<vmem>>, %arg10: memref<6x41xf32, #tpu.memory_space<vmem>>) attributes {dimension_semantics = [#tpu.dimension_semantics<parallel>, #tpu.dimension_semantics<parallel>, #tpu.dimension_semantics<parallel>], iteration_bounds = array<i64: 2, 5, 7>, scalar_prefetch = 0 : i64, scratch_operands = 1 : i64, tpu.core_type = #tpu.core_type<tc>, window_params = [{transform_indices = @transform_0, window_bounds = array<i64: 1, 1, 1, 5, 14>}, {transform_indices = @transform_1, window_bounds = array<i64: 1, 1, 1, 5, 14>}, {transform_indices = @transform_2, window_bounds = array<i64: 1, 1, 1, 5, 14>}, {transform_indices = @transform_3, window_bounds = array<i64: 1, 1, 1, 5, 14>}, {pipeline_mode = #tpu.pipeline_mode<synchronous>, transform_indices = @transform_4, window_bounds = array<i64: 2, 2, 2, 14, 41>}, {pipeline_mode = #tpu.pipeline_mode<synchronous>, transform_indices = @transform_5, window_bounds = array<i64: 1, 41>}, {transform_indices = @transform_6, window_bounds = array<i64: 1, 1, 1, 6, 41>}]} {
    %cst = arith.constant 0.000000e+00 : f32
    %0 = vector.broadcast %cst : f32 to vector<6x41xf32>
    %c0 = arith.constant 0 : index
    %c0_0 = arith.constant 0 : index
    %1 = vector.load %arg10[%c0, %c0_0] : memref<6x41xf32, #tpu.memory_space<vmem>>, vector<6x41xf32>
    tpu.vector_store %arg10[%c0, %c0_0], %0 {strides = array<i32>} : memref<6x41xf32, #tpu.memory_space<vmem>>, vector<6x41xf32>,
    %c4_i32 = arith.constant 4 : i32
    %2 = arith.cmpi slt, %arg1, %c4_i32 : i32
    %c6_i32 = arith.constant 6 : i32
    %3 = arith.cmpi slt, %arg2, %c6_i32 : i32
    %4 = arith.andi %2, %3 : i1
    %5 = arith.extui %4 : i1 to i32
    %c0_i32 = arith.constant 0 : i32
    %6 = arith.cmpi ne, %5, %c0_i32 : i32
    scf.if %6 {
      %c0_20 = arith.constant 0 : index
      %c0_21 = arith.constant 0 : index
      %c0_22 = arith.constant 0 : index
      %c0_23 = arith.constant 0 : index
      %c0_24 = arith.constant 0 : index
      %34 = vector.load %arg3[%c0_20, %c0_21, %c0_22, %c0_23, %c0_24] : memref<1x1x1x5x14xbf16, #tpu.memory_space<vmem>>, vector<1x1x1x5x14xbf16>
      %35 = vector.shape_cast %34 : vector<1x1x1x5x14xbf16> to vector<5x14xbf16>
      %c0_25 = arith.constant 0 : index
      %c0_26 = arith.constant 0 : index
      %c0_27 = arith.constant 0 : index
      %c0_28 = arith.constant 0 : index
      %c0_29 = arith.constant 0 : index
      %36 = vector.load %arg7[%c0_25, %c0_26, %c0_27, %c0_28, %c0_29] : memref<2x2x2x14x41xbf16, #tpu.memory_space<vmem>>, vector<1x1x1x14x41xbf16>
      %37 = vector.shape_cast %36 : vector<1x1x1x14x41xbf16> to vector<14x41xbf16>
      %cst_30 = arith.constant dense<0.000000e+00> : vector<5x41xf32>
      %38 = tpu.matmul %35, %37, %cst_30 {dimension_numbers = #tpu.dot_dimension_numbers<[1], [0], [0], [1], [0, 0, 1, 1], [], []>} : vector<5x14xbf16>, vector<14x41xbf16>, vector<5x41xf32> -> vector<5x41xf32>
      %c0_31 = arith.constant 0 : index
      %c0_32 = arith.constant 0 : index
      %39 = vector.load %arg10[%c0_31, %c0_32] : memref<6x41xf32, #tpu.memory_space<vmem>>, vector<5x41xf32>
      %40 = arith.addf %39, %38 : vector<5x41xf32>
      %c0_33 = arith.constant 0 : index
      %c0_34 = arith.constant 0 : index
      %41 = vector.load %arg10[%c0_33, %c0_34] : memref<6x41xf32, #tpu.memory_space<vmem>>, vector<5x41xf32>
      tpu.vector_store %arg10[%c0_33, %c0_34], %40 {strides = array<i32>} : memref<6x41xf32, #tpu.memory_space<vmem>>, vector<5x41xf32>,
      %c0_35 = arith.constant 0 : index
      %c0_36 = arith.constant 0 : index
      %c1 = arith.constant 1 : index
      %c0_37 = arith.constant 0 : index
      %c0_38 = arith.constant 0 : index
      %42 = vector.load %arg7[%c0_35, %c0_36, %c1, %c0_37, %c0_38] : memref<2x2x2x14x41xbf16, #tpu.memory_space<vmem>>, vector<1x1x1x14x41xbf16>
      %43 = vector.shape_cast %42 : vector<1x1x1x14x41xbf16> to vector<14x41xbf16>
      %cst_39 = arith.constant dense<0.000000e+00> : vector<5x41xf32>
      %44 = tpu.matmul %35, %43, %cst_39 {dimension_numbers = #tpu.dot_dimension_numbers<[1], [0], [0], [1], [0, 0, 1, 1], [], []>} : vector<5x14xbf16>, vector<14x41xbf16>, vector<5x41xf32> -> vector<5x41xf32>
      %c1_40 = arith.constant 1 : index
      %c0_41 = arith.constant 0 : index
      %45 = vector.load %arg10[%c1_40, %c0_41] : memref<6x41xf32, #tpu.memory_space<vmem>>, vector<5x41xf32>
      %46 = arith.addf %45, %44 : vector<5x41xf32>
      %c1_42 = arith.constant 1 : index
      %c0_43 = arith.constant 0 : index
      %47 = vector.load %arg10[%c1_42, %c0_43] : memref<6x41xf32, #tpu.memory_space<vmem>>, vector<5x41xf32>
      tpu.vector_store %arg10[%c1_42, %c0_43], %46 {strides = array<i32>} : memref<6x41xf32, #tpu.memory_space<vmem>>, vector<5x41xf32>,
    } else {
    }
    %c4_i32_1 = arith.constant 4 : i32
    %7 = arith.cmpi slt, %arg1, %c4_i32_1 : i32
    %c1_i32 = arith.constant 1 : i32
    %8 = arith.cmpi sge, %arg2, %c1_i32 : i32
    %9 = arith.andi %7, %8 : i1
    %10 = arith.extui %9 : i1 to i32
    %c0_i32_2 = arith.constant 0 : i32
    %11 = arith.cmpi ne, %10, %c0_i32_2 : i32
    scf.if %11 {
      %c0_20 = arith.constant 0 : index
      %c0_21 = arith.constant 0 : index
      %c0_22 = arith.constant 0 : index
      %c0_23 = arith.constant 0 : index
      %c0_24 = arith.constant 0 : index
      %34 = vector.load %arg4[%c0_20, %c0_21, %c0_22, %c0_23, %c0_24] : memref<1x1x1x5x14xbf16, #tpu.memory_space<vmem>>, vector<1x1x1x5x14xbf16>
      %35 = vector.shape_cast %34 : vector<1x1x1x5x14xbf16> to vector<5x14xbf16>
      %c0_25 = arith.constant 0 : index
      %c1 = arith.constant 1 : index
      %c0_26 = arith.constant 0 : index
      %c0_27 = arith.constant 0 : index
      %c0_28 = arith.constant 0 : index
      %36 = vector.load %arg7[%c0_25, %c1, %c0_26, %c0_27, %c0_28] : memref<2x2x2x14x41xbf16, #tpu.memory_space<vmem>>, vector<1x1x1x14x41xbf16>
      %37 = vector.shape_cast %36 : vector<1x1x1x14x41xbf16> to vector<14x41xbf16>
      %cst_29 = arith.constant dense<0.000000e+00> : vector<5x41xf32>
      %38 = tpu.matmul %35, %37, %cst_29 {dimension_numbers = #tpu.dot_dimension_numbers<[1], [0], [0], [1], [0, 0, 1, 1], [], []>} : vector<5x14xbf16>, vector<14x41xbf16>, vector<5x41xf32> -> vector<5x41xf32>
      %c0_30 = arith.constant 0 : index
      %c0_31 = arith.constant 0 : index
      %39 = vector.load %arg10[%c0_30, %c0_31] : memref<6x41xf32, #tpu.memory_space<vmem>>, vector<5x41xf32>
      %40 = arith.addf %39, %38 : vector<5x41xf32>
      %c0_32 = arith.constant 0 : index
      %c0_33 = arith.constant 0 : index
      %41 = vector.load %arg10[%c0_32, %c0_33] : memref<6x41xf32, #tpu.memory_space<vmem>>, vector<5x41xf32>
      tpu.vector_store %arg10[%c0_32, %c0_33], %40 {strides = array<i32>} : memref<6x41xf32, #tpu.memory_space<vmem>>, vector<5x41xf32>,
      %c0_34 = arith.constant 0 : index
      %c1_35 = arith.constant 1 : index
      %c1_36 = arith.constant 1 : index
      %c0_37 = arith.constant 0 : index
      %c0_38 = arith.constant 0 : index
      %42 = vector.load %arg7[%c0_34, %c1_35, %c1_36, %c0_37, %c0_38] : memref<2x2x2x14x41xbf16, #tpu.memory_space<vmem>>, vector<1x1x1x14x41xbf16>
      %43 = vector.shape_cast %42 : vector<1x1x1x14x41xbf16> to vector<14x41xbf16>
      %cst_39 = arith.constant dense<0.000000e+00> : vector<5x41xf32>
      %44 = tpu.matmul %35, %43, %cst_39 {dimension_numbers = #tpu.dot_dimension_numbers<[1], [0], [0], [1], [0, 0, 1, 1], [], []>} : vector<5x14xbf16>, vector<14x41xbf16>, vector<5x41xf32> -> vector<5x41xf32>
      %c1_40 = arith.constant 1 : index
      %c0_41 = arith.constant 0 : index
      %45 = vector.load %arg10[%c1_40, %c0_41] : memref<6x41xf32, #tpu.memory_space<vmem>>, vector<5x41xf32>
      %46 = arith.addf %45, %44 : vector<5x41xf32>
      %c1_42 = arith.constant 1 : index
      %c0_43 = arith.constant 0 : index
      %47 = vector.load %arg10[%c1_42, %c0_43] : memref<6x41xf32, #tpu.memory_space<vmem>>, vector<5x41xf32>
      tpu.vector_store %arg10[%c1_42, %c0_43], %46 {strides = array<i32>} : memref<6x41xf32, #tpu.memory_space<vmem>>, vector<5x41xf32>,
    } else {
    }
    %c1_i32_3 = arith.constant 1 : i32
    %12 = arith.cmpi sge, %arg1, %c1_i32_3 : i32
    %c6_i32_4 = arith.constant 6 : i32
    %13 = arith.cmpi slt, %arg2, %c6_i32_4 : i32
    %14 = arith.andi %12, %13 : i1
    %15 = arith.extui %14 : i1 to i32
    %c0_i32_5 = arith.constant 0 : i32
    %16 = arith.cmpi ne, %15, %c0_i32_5 : i32
    scf.if %16 {
      %c0_20 = arith.constant 0 : index
      %c0_21 = arith.constant 0 : index
      %c0_22 = arith.constant 0 : index
      %c0_23 = arith.constant 0 : index
      %c0_24 = arith.constant 0 : index
      %34 = vector.load %arg5[%c0_20, %c0_21, %c0_22, %c0_23, %c0_24] : memref<1x1x1x5x14xbf16, #tpu.memory_space<vmem>>, vector<1x1x1x5x14xbf16>
      %35 = vector.shape_cast %34 : vector<1x1x1x5x14xbf16> to vector<5x14xbf16>
      %c1 = arith.constant 1 : index
      %c0_25 = arith.constant 0 : index
      %c0_26 = arith.constant 0 : index
      %c0_27 = arith.constant 0 : index
      %c0_28 = arith.constant 0 : index
      %36 = vector.load %arg7[%c1, %c0_25, %c0_26, %c0_27, %c0_28] : memref<2x2x2x14x41xbf16, #tpu.memory_space<vmem>>, vector<1x1x1x14x41xbf16>
      %37 = vector.shape_cast %36 : vector<1x1x1x14x41xbf16> to vector<14x41xbf16>
      %cst_29 = arith.constant dense<0.000000e+00> : vector<5x41xf32>
      %38 = tpu.matmul %35, %37, %cst_29 {dimension_numbers = #tpu.dot_dimension_numbers<[1], [0], [0], [1], [0, 0, 1, 1], [], []>} : vector<5x14xbf16>, vector<14x41xbf16>, vector<5x41xf32> -> vector<5x41xf32>
      %c0_30 = arith.constant 0 : index
      %c0_31 = arith.constant 0 : index
      %39 = vector.load %arg10[%c0_30, %c0_31] : memref<6x41xf32, #tpu.memory_space<vmem>>, vector<5x41xf32>
      %40 = arith.addf %39, %38 : vector<5x41xf32>
      %c0_32 = arith.constant 0 : index
      %c0_33 = arith.constant 0 : index
      %41 = vector.load %arg10[%c0_32, %c0_33] : memref<6x41xf32, #tpu.memory_space<vmem>>, vector<5x41xf32>
      tpu.vector_store %arg10[%c0_32, %c0_33], %40 {strides = array<i32>} : memref<6x41xf32, #tpu.memory_space<vmem>>, vector<5x41xf32>,
      %c1_34 = arith.constant 1 : index
      %c0_35 = arith.constant 0 : index
      %c1_36 = arith.constant 1 : index
      %c0_37 = arith.constant 0 : index
      %c0_38 = arith.constant 0 : index
      %42 = vector.load %arg7[%c1_34, %c0_35, %c1_36, %c0_37, %c0_38] : memref<2x2x2x14x41xbf16, #tpu.memory_space<vmem>>, vector<1x1x1x14x41xbf16>
      %43 = vector.shape_cast %42 : vector<1x1x1x14x41xbf16> to vector<14x41xbf16>
      %cst_39 = arith.constant dense<0.000000e+00> : vector<5x41xf32>
      %44 = tpu.matmul %35, %43, %cst_39 {dimension_numbers = #tpu.dot_dimension_numbers<[1], [0], [0], [1], [0, 0, 1, 1], [], []>} : vector<5x14xbf16>, vector<14x41xbf16>, vector<5x41xf32> -> vector<5x41xf32>
      %c1_40 = arith.constant 1 : index
      %c0_41 = arith.constant 0 : index
      %45 = vector.load %arg10[%c1_40, %c0_41] : memref<6x41xf32, #tpu.memory_space<vmem>>, vector<5x41xf32>
      %46 = arith.addf %45, %44 : vector<5x41xf32>
      %c1_42 = arith.constant 1 : index
      %c0_43 = arith.constant 0 : index
      %47 = vector.load %arg10[%c1_42, %c0_43] : memref<6x41xf32, #tpu.memory_space<vmem>>, vector<5x41xf32>
      tpu.vector_store %arg10[%c1_42, %c0_43], %46 {strides = array<i32>} : memref<6x41xf32, #tpu.memory_space<vmem>>, vector<5x41xf32>,
    } else {
    }
    %c1_i32_6 = arith.constant 1 : i32
    %17 = arith.cmpi sge, %arg1, %c1_i32_6 : i32
    %c1_i32_7 = arith.constant 1 : i32
    %18 = arith.cmpi sge, %arg2, %c1_i32_7 : i32
    %19 = arith.andi %17, %18 : i1
    %20 = arith.extui %19 : i1 to i32
    %c0_i32_8 = arith.constant 0 : i32
    %21 = arith.cmpi ne, %20, %c0_i32_8 : i32
    scf.if %21 {
      %c0_20 = arith.constant 0 : index
      %c0_21 = arith.constant 0 : index
      %c0_22 = arith.constant 0 : index
      %c0_23 = arith.constant 0 : index
      %c0_24 = arith.constant 0 : index
      %34 = vector.load %arg6[%c0_20, %c0_21, %c0_22, %c0_23, %c0_24] : memref<1x1x1x5x14xbf16, #tpu.memory_space<vmem>>, vector<1x1x1x5x14xbf16>
      %35 = vector.shape_cast %34 : vector<1x1x1x5x14xbf16> to vector<5x14xbf16>
      %c1 = arith.constant 1 : index
      %c1_25 = arith.constant 1 : index
      %c0_26 = arith.constant 0 : index
      %c0_27 = arith.constant 0 : index
      %c0_28 = arith.constant 0 : index
      %36 = vector.load %arg7[%c1, %c1_25, %c0_26, %c0_27, %c0_28] : memref<2x2x2x14x41xbf16, #tpu.memory_space<vmem>>, vector<1x1x1x14x41xbf16>
      %37 = vector.shape_cast %36 : vector<1x1x1x14x41xbf16> to vector<14x41xbf16>
      %cst_29 = arith.constant dense<0.000000e+00> : vector<5x41xf32>
      %38 = tpu.matmul %35, %37, %cst_29 {dimension_numbers = #tpu.dot_dimension_numbers<[1], [0], [0], [1], [0, 0, 1, 1], [], []>} : vector<5x14xbf16>, vector<14x41xbf16>, vector<5x41xf32> -> vector<5x41xf32>
      %c0_30 = arith.constant 0 : index
      %c0_31 = arith.constant 0 : index
      %39 = vector.load %arg10[%c0_30, %c0_31] : memref<6x41xf32, #tpu.memory_space<vmem>>, vector<5x41xf32>
      %40 = arith.addf %39, %38 : vector<5x41xf32>
      %c0_32 = arith.constant 0 : index
      %c0_33 = arith.constant 0 : index
      %41 = vector.load %arg10[%c0_32, %c0_33] : memref<6x41xf32, #tpu.memory_space<vmem>>, vector<5x41xf32>
      tpu.vector_store %arg10[%c0_32, %c0_33], %40 {strides = array<i32>} : memref<6x41xf32, #tpu.memory_space<vmem>>, vector<5x41xf32>,
      %c1_34 = arith.constant 1 : index
      %c1_35 = arith.constant 1 : index
      %c1_36 = arith.constant 1 : index
      %c0_37 = arith.constant 0 : index
      %c0_38 = arith.constant 0 : index
      %42 = vector.load %arg7[%c1_34, %c1_35, %c1_36, %c0_37, %c0_38] : memref<2x2x2x14x41xbf16, #tpu.memory_space<vmem>>, vector<1x1x1x14x41xbf16>
      %43 = vector.shape_cast %42 : vector<1x1x1x14x41xbf16> to vector<14x41xbf16>
      %cst_39 = arith.constant dense<0.000000e+00> : vector<5x41xf32>
      %44 = tpu.matmul %35, %43, %cst_39 {dimension_numbers = #tpu.dot_dimension_numbers<[1], [0], [0], [1], [0, 0, 1, 1], [], []>} : vector<5x14xbf16>, vector<14x41xbf16>, vector<5x41xf32> -> vector<5x41xf32>
      %c1_40 = arith.constant 1 : index
      %c0_41 = arith.constant 0 : index
      %45 = vector.load %arg10[%c1_40, %c0_41] : memref<6x41xf32, #tpu.memory_space<vmem>>, vector<5x41xf32>
      %46 = arith.addf %45, %44 : vector<5x41xf32>
      %c1_42 = arith.constant 1 : index
      %c0_43 = arith.constant 0 : index
      %47 = vector.load %arg10[%c1_42, %c0_43] : memref<6x41xf32, #tpu.memory_space<vmem>>, vector<5x41xf32>
      tpu.vector_store %arg10[%c1_42, %c0_43], %46 {strides = array<i32>} : memref<6x41xf32, #tpu.memory_space<vmem>>, vector<5x41xf32>,
    } else {
    }
    %c0_9 = arith.constant 0 : index
    %c0_10 = arith.constant 0 : index
    %22 = vector.load %arg10[%c0_9, %c0_10] : memref<6x41xf32, #tpu.memory_space<vmem>>, vector<6x41xf32>
    %c0_11 = arith.constant 0 : index
    %c0_12 = arith.constant 0 : index
    %23 = vector.load %arg8[%c0_11, %c0_12] : memref<1x41xf32, #tpu.memory_space<vmem>>, vector<1x41xf32>
    %24 = vector.broadcast %23 : vector<1x41xf32> to vector<6x41xf32>
    %25 = arith.addf %22, %24 : vector<6x41xf32>
    %cst_13 = arith.constant 0.000000e+00 : f32
    %26 = vector.broadcast %cst_13 : f32 to vector<6x41xf32>
    %27 = arith.cmpf ogt, %25, %26 : vector<6x41xf32>
    %cst_14 = arith.constant -8.000000e-02 : f32
    %28 = vector.broadcast %cst_14 : f32 to vector<6x41xf32>
    %29 = arith.mulf %25, %28 : vector<6x41xf32>
    %30 = arith.select %27, %25, %29 : vector<6x41xi1>, vector<6x41xf32>
    %c0_15 = arith.constant 0 : index
    %c0_16 = arith.constant 0 : index
    %c0_17 = arith.constant 0 : index
    %c0_18 = arith.constant 0 : index
    %c0_19 = arith.constant 0 : index
    %31 = vector.load %arg9[%c0_15, %c0_16, %c0_17, %c0_18, %c0_19] : memref<1x1x1x6x41xf32, #tpu.memory_space<vmem>>, vector<1x1x1x6x41xf32>
    %32 = vector.shape_cast %31 : vector<1x1x1x6x41xf32> to vector<6x41xf32>
    %33 = vector.shape_cast %30 : vector<6x41xf32> to vector<1x1x1x6x41xf32>
    tpu.vector_store %arg9[%c0_15, %c0_16, %c0_17, %c0_18, %c0_19], %33 {strides = array<i32>} : memref<1x1x1x6x41xf32, #tpu.memory_space<vmem>>, vector<1x1x1x6x41xf32>,
    return
  }
  func.func @transform_0(%arg0: i32, %arg1: i32, %arg2: i32) -> (i32, i32, i32, i32, i32) {
    %c0_i32 = arith.constant 0 : i32
    %0 = arith.subi %arg1, %c0_i32 : i32
    %c0_i32_0 = arith.constant 0 : i32
    %c3_i32 = arith.constant 3 : i32
    %1 = arith.maxsi %c0_i32_0, %0 : i32
    %2 = arith.minsi %c3_i32, %1 : i32
    %c0_i32_1 = arith.constant 0 : i32
    %3 = arith.subi %arg2, %c0_i32_1 : i32
    %c0_i32_2 = arith.constant 0 : i32
    %c5_i32 = arith.constant 5 : i32
    %4 = arith.maxsi %c0_i32_2, %3 : i32
    %5 = arith.minsi %c5_i32, %4 : i32
    %c0_i32_3 = arith.constant 0 : i32
    %c0_i32_4 = arith.constant 0 : i32
    %c0_i32_5 = arith.constant 0 : i32
    return %arg0, %2, %5, %c0_i32_3, %c0_i32_4 : i32, i32, i32, i32, i32
  }
  func.func @transform_1(%arg0: i32, %arg1: i32, %arg2: i32) -> (i32, i32, i32, i32, i32) {
    %c0_i32 = arith.constant 0 : i32
    %0 = arith.subi %arg1, %c0_i32 : i32
    %c0_i32_0 = arith.constant 0 : i32
    %c3_i32 = arith.constant 3 : i32
    %1 = arith.maxsi %c0_i32_0, %0 : i32
    %2 = arith.minsi %c3_i32, %1 : i32
    %c1_i32 = arith.constant 1 : i32
    %3 = arith.subi %arg2, %c1_i32 : i32
    %c0_i32_1 = arith.constant 0 : i32
    %c5_i32 = arith.constant 5 : i32
    %4 = arith.maxsi %c0_i32_1, %3 : i32
    %5 = arith.minsi %c5_i32, %4 : i32
    %c0_i32_2 = arith.constant 0 : i32
    %c0_i32_3 = arith.constant 0 : i32
    %c0_i32_4 = arith.constant 0 : i32
    return %arg0, %2, %5, %c0_i32_2, %c0_i32_3 : i32, i32, i32, i32, i32
  }
  func.func @transform_2(%arg0: i32, %arg1: i32, %arg2: i32) -> (i32, i32, i32, i32, i32) {
    %c1_i32 = arith.constant 1 : i32
    %0 = arith.subi %arg1, %c1_i32 : i32
    %c0_i32 = arith.constant 0 : i32
    %c3_i32 = arith.constant 3 : i32
    %1 = arith.maxsi %c0_i32, %0 : i32
    %2 = arith.minsi %c3_i32, %1 : i32
    %c0_i32_0 = arith.constant 0 : i32
    %3 = arith.subi %arg2, %c0_i32_0 : i32
    %c0_i32_1 = arith.constant 0 : i32
    %c5_i32 = arith.constant 5 : i32
    %4 = arith.maxsi %c0_i32_1, %3 : i32
    %5 = arith.minsi %c5_i32, %4 : i32
    %c0_i32_2 = arith.constant 0 : i32
    %c0_i32_3 = arith.constant 0 : i32
    %c0_i32_4 = arith.constant 0 : i32
    return %arg0, %2, %5, %c0_i32_2, %c0_i32_3 : i32, i32, i32, i32, i32
  }
  func.func @transform_3(%arg0: i32, %arg1: i32, %arg2: i32) -> (i32, i32, i32, i32, i32) {
    %c1_i32 = arith.constant 1 : i32
    %0 = arith.subi %arg1, %c1_i32 : i32
    %c0_i32 = arith.constant 0 : i32
    %c3_i32 = arith.constant 3 : i32
    %1 = arith.maxsi %c0_i32, %0 : i32
    %2 = arith.minsi %c3_i32, %1 : i32
    %c1_i32_0 = arith.constant 1 : i32
    %3 = arith.subi %arg2, %c1_i32_0 : i32
    %c0_i32_1 = arith.constant 0 : i32
    %c5_i32 = arith.constant 5 : i32
    %4 = arith.maxsi %c0_i32_1, %3 : i32
    %5 = arith.minsi %c5_i32, %4 : i32
    %c0_i32_2 = arith.constant 0 : i32
    %c0_i32_3 = arith.constant 0 : i32
    %c0_i32_4 = arith.constant 0 : i32
    return %arg0, %2, %5, %c0_i32_2, %c0_i32_3 : i32, i32, i32, i32, i32
  }
  func.func @transform_4(%arg0: i32, %arg1: i32, %arg2: i32) -> (i32, i32, i32, i32, i32) {
    %c0_i32 = arith.constant 0 : i32
    %c0_i32_0 = arith.constant 0 : i32
    %c0_i32_1 = arith.constant 0 : i32
    %c0_i32_2 = arith.constant 0 : i32
    %c0_i32_3 = arith.constant 0 : i32
    %c0_i32_4 = arith.constant 0 : i32
    return %c0_i32, %c0_i32_0, %c0_i32_1, %c0_i32_2, %c0_i32_3 : i32, i32, i32, i32, i32
  }
  func.func @transform_5(%arg0: i32, %arg1: i32, %arg2: i32) -> (i32, i32) {
    %c0_i32 = arith.constant 0 : i32
    %c0_i32_0 = arith.constant 0 : i32
    %c0_i32_1 = arith.constant 0 : i32
    return %c0_i32, %c0_i32_0 : i32, i32
  }
  func.func @transform_6(%arg0: i32, %arg1: i32, %arg2: i32) -> (i32, i32, i32, i32, i32) {
    %c0_i32 = arith.constant 0 : i32
    %c0_i32_0 = arith.constant 0 : i32
    %c0_i32_1 = arith.constant 0 : i32
    return %arg0, %arg1, %arg2, %c0_i32, %c0_i32_0 : i32, i32, i32, i32, i32
  }
}

</mosaic_0001>

<llo_original>
// kernel: conv_transpose3d_leaky.1
$region0: #{conv_transpose3d_leaky.1}
  #allocation0 [shape = 'u32[]', space=smem, size = 0x4, offset = 0x4, fixed_abs, tag = 'smem constant byte address 0x4 - core index']
  #allocation1 [shape = 'u32[72,128]{1,0:T(1,128)}', space=vmem, size = 0x9000, scoped, tag = 'internal scratch']
  #allocation2 [shape = 'f32[6,41]{1,0:T(8,128)}', space=vmem, size = 0x1000, scoped, tag = 'scratch operand']
  %s0 = inlined_call_operand.vmem [shape: bf16[2,4,6,5,14], index: 0, kind: input, shape index: {}, may-alias: {0,1,2,3}]
  %s1 = inlined_call_operand.vmem [shape: bf16[2,4,6,5,14], index: 1, kind: input, shape index: {}, may-alias: {0,1,2,3}]
  %s2 = inlined_call_operand.vmem [shape: bf16[2,4,6,5,14], index: 2, kind: input, shape index: {}, may-alias: {0,1,2,3}]
  %s3 = inlined_call_operand.vmem [shape: bf16[2,4,6,5,14], index: 3, kind: input, shape index: {}, may-alias: {0,1,2,3}]
  %s4 = inlined_call_operand.vmem [shape: bf16[2,2,2,14,41], index: 4, kind: input, shape index: {}]
  %s5 = inlined_call_operand.vmem [shape: f32[1,41], index: 5, kind: input, shape index: {}]
  %s6 = inlined_call_operand.vmem [shape: f32[2,5,7,6,41], index: 6, kind: output, shape index: {}]
  %s7 = sld [smem:[#allocation0]]
  $region73: #{conv_transpose3d_leaky.1} parent=0
    _
  %s9 = ssub.s32 1, %s7
  %s10 = scalar_select 0, %s9, %s7
  loop: start=0, step=1, limit=72
  $region2: #{conv_transpose3d_leaky.1} parent=0 // loop_pre_header
    _
  $region3: #{conv_transpose3d_leaky.1} parent=0 // loop_header
    %s12 = sphi 0, %s16
    %p13 = scmp.ge.s32.totalorder %s12, 72
    %s19 = sphi 0, %s38
    %s20 = sphi 0, %s34
    %s21 = sphi 0, %s30
    %s22 = sphi 0, %s19
    %s23 = sphi 0, %s20
    %s24 = sphi 0, %s21
    %s25 = sphi 0, %s22
    %s26 = sphi 0, %s23
    %s27 = sphi 0, %s24
    %s61 = sphi 0, %s63
    %s64 = sphi 0, %s61
    %s65 = sphi 0, %s64
    %s81 = sphi 0, %s65
    %s109 = sphi 0, %s111
    %s112 = sphi 0, %s109
    %s113 = sphi 0, %s112
    %s129 = sphi 0, %s113
    %s157 = sphi 0, %s159
    %s160 = sphi 0, %s157
    %s161 = sphi 0, %s160
    %s177 = sphi 0, %s161
    %s207 = sphi 0, %s209
    %s210 = sphi 0, %s207
    %s211 = sphi 0, %s210
    %s227 = sphi 0, %s211
    %s231 = sphi 0, %s231
    %s233 = sphi 0, %s231
    %s234 = sphi 0, %s233
    %s248 = sphi 0, %s234
    %s252 = sphi 0, %s252
    %s254 = sphi 0, %s252
    %s255 = sphi 0, %s254
    %s269 = sphi 0, %s255
    %s279 = sphi 0, %s281
    %s282 = sphi 0, %s279
    %s283 = sphi 0, %s282
    %s299 = sphi 0, %s283
  $region4: #{conv_transpose3d_leaky.1} parent=0 // loop_header_branch
    %15 = sbr.rel (%p13) target = $region8
  $region5: #{conv_transpose3d_leaky.1} parent=0 // loop_body
    %s17 = ssub.s32 %s12, 1
    %s18 = ssub.s32 %s12, 2
    %s28 = sadd.s32 1, %s21
    %p29 = scmp.ge.s32.totalorder %s28, 7
    %s30 = scalar_select %p29, 0, %s28
    %s31 = sadd.s32 1, %s20
    %s32 = scalar_select %p29, %s31, %s20
    %p33 = scmp.ge.s32.totalorder %s32, 5
    %s34 = scalar_select %p33, 0, %s32
    %s35 = sadd.s32 1, %s19
    %s36 = scalar_select %p33, %s35, %s19
    %p37 = scmp.ge.s32.totalorder %s36, 2
    %s38 = scalar_select %p37, 0, %s36
    %p39 = scmp.gt.s32.totalorder %s20, 0
    %s40 = scalar_select %p39, %s20, 0
    %p41 = scmp.lt.s32.totalorder %s40, 3
    %s42 = scalar_select %p41, %s40, 3
    %p43 = scmp.gt.s32.totalorder %s21, 0
    %s44 = scalar_select %p43, %s21, 0
    %p45 = scmp.lt.s32.totalorder %s44, 5
    %s46 = scalar_select %p45, %s44, 5
    %p47 = scmp.gt.s32.totalorder %s34, 0
    %s48 = scalar_select %p47, %s34, 0
    %p49 = scmp.lt.s32.totalorder %s48, 3
    %s50 = scalar_select %p49, %s48, 3
    %p51 = scmp.gt.s32.totalorder %s30, 0
    %s52 = scalar_select %p51, %s30, 0
    %p53 = scmp.lt.s32.totalorder %s52, 5
    %s54 = scalar_select %p53, %s52, 5
    %s55 = ssub.s32 %s19, %s38
    %s56 = ssub.s32 %s42, %s50
    %s57 = sor.u32 %s55, %s56
    %s58 = ssub.s32 %s46, %s54
    %s59 = sor.u32 %s57, %s58
    %p60 = scmp.eq.s32.totalorder %s59, 0
    %s62 = sadd.s32 %s61, 1
    %s63 = scalar_select %p60, %s61, %s62
    %p66 = pneg %p60
    %p67 = scmp.eq.s32.totalorder %s12, 69
    %p68 = por %p66, %p67
    %p69 = scmp.ne.s32.totalorder %s61, %s64
    %p70 = scmp.eq.s32.totalorder %s12, 0
    %p71 = por %p69, %p70
    %p72 = scmp.ne.s32.totalorder %s61, %s64
    %p73 = scmp.eq.s32.totalorder %s17, 69
    %p74 = por %p72, %p73
    %p75 = scmp.ne.s32.totalorder %s64, %s65
    %p76 = scmp.eq.s32.totalorder %s17, 0
    %p77 = por %p75, %p76
    %p78 = scmp.ne.s32.totalorder %s64, %s65
    %p79 = scmp.eq.s32.totalorder %s18, 69
    %p80 = por %p78, %p79
    %p82 = scmp.ne.s32.totalorder %s65, %s81
    %p83 = scmp.eq.s32.totalorder %s18, 0
    %p84 = por %p82, %p83
    %p85 = scmp.gt.s32.totalorder %s20, 0
    %s86 = scalar_select %p85, %s20, 0
    %p87 = scmp.lt.s32.totalorder %s86, 3
    %s88 = scalar_select %p87, %s86, 3
    %s89 = ssub.s32 %s21, 1
    %p90 = scmp.gt.s32.totalorder %s89, 0
    %s91 = scalar_select %p90, %s89, 0
    %p92 = scmp.lt.s32.totalorder %s91, 5
    %s93 = scalar_select %p92, %s91, 5
    %p94 = scmp.gt.s32.totalorder %s34, 0
    %s95 = scalar_select %p94, %s34, 0
    %p96 = scmp.lt.s32.totalorder %s95, 3
    %s97 = scalar_select %p96, %s95, 3
    %s98 = ssub.s32 %s30, 1
    %p99 = scmp.gt.s32.totalorder %s98, 0
    %s100 = scalar_select %p99, %s98, 0
    %p101 = scmp.lt.s32.totalorder %s100, 5
    %s102 = scalar_select %p101, %s100, 5
    %s103 = ssub.s32 %s19, %s38
    %s104 = ssub.s32 %s88, %s97
    %s105 = sor.u32 %s103, %s104
    %s106 = ssub.s32 %s93, %s102
    %s107 = sor.u32 %s105, %s106
    %p108 = scmp.eq.s32.totalorder %s107, 0
    %s110 = sadd.s32 %s109, 1
    %s111 = scalar_select %p108, %s109, %s110
    %p114 = pneg %p108
    %p115 = scmp.eq.s32.totalorder %s12, 69
    %p116 = por %p114, %p115
    %p117 = scmp.ne.s32.totalorder %s109, %s112
    %p118 = scmp.eq.s32.totalorder %s12, 0
    %p119 = por %p117, %p118
    %p120 = scmp.ne.s32.totalorder %s109, %s112
    %p121 = scmp.eq.s32.totalorder %s17, 69
    %p122 = por %p120, %p121
    %p123 = scmp.ne.s32.totalorder %s112, %s113
    %p124 = scmp.eq.s32.totalorder %s17, 0
    %p125 = por %p123, %p124
    %p126 = scmp.ne.s32.totalorder %s112, %s113
    %p127 = scmp.eq.s32.totalorder %s18, 69
    %p128 = por %p126, %p127
    %p130 = scmp.ne.s32.totalorder %s113, %s129
    %p131 = scmp.eq.s32.totalorder %s18, 0
    %p132 = por %p130, %p131
    %s133 = ssub.s32 %s20, 1
    %p134 = scmp.gt.s32.totalorder %s133, 0
    %s135 = scalar_select %p134, %s133, 0
    %p136 = scmp.lt.s32.totalorder %s135, 3
    %s137 = scalar_select %p136, %s135, 3
    %p138 = scmp.gt.s32.totalorder %s21, 0
    %s139 = scalar_select %p138, %s21, 0
    %p140 = scmp.lt.s32.totalorder %s139, 5
    %s141 = scalar_select %p140, %s139, 5
    %s142 = ssub.s32 %s34, 1
    %p143 = scmp.gt.s32.totalorder %s142, 0
    %s144 = scalar_select %p143, %s142, 0
    %p145 = scmp.lt.s32.totalorder %s144, 3
    %s146 = scalar_select %p145, %s144, 3
    %p147 = scmp.gt.s32.totalorder %s30, 0
    %s148 = scalar_select %p147, %s30, 0
    %p149 = scmp.lt.s32.totalorder %s148, 5
    %s150 = scalar_select %p149, %s148, 5
    %s151 = ssub.s32 %s19, %s38
    %s152 = ssub.s32 %s137, %s146
    %s153 = sor.u32 %s151, %s152
    %s154 = ssub.s32 %s141, %s150
    %s155 = sor.u32 %s153, %s154
    %p156 = scmp.eq.s32.totalorder %s155, 0
    %s158 = sadd.s32 %s157, 1
    %s159 = scalar_select %p156, %s157, %s158
    %p162 = pneg %p156
    %p163 = scmp.eq.s32.totalorder %s12, 69
    %p164 = por %p162, %p163
    %p165 = scmp.ne.s32.totalorder %s157, %s160
    %p166 = scmp.eq.s32.totalorder %s12, 0
    %p167 = por %p165, %p166
    %p168 = scmp.ne.s32.totalorder %s157, %s160
    %p169 = scmp.eq.s32.totalorder %s17, 69
    %p170 = por %p168, %p169
    %p171 = scmp.ne.s32.totalorder %s160, %s161
    %p172 = scmp.eq.s32.totalorder %s17, 0
    %p173 = por %p171, %p172
    %p174 = scmp.ne.s32.totalorder %s160, %s161
    %p175 = scmp.eq.s32.totalorder %s18, 69
    %p176 = por %p174, %p175
    %p178 = scmp.ne.s32.totalorder %s161, %s177
    %p179 = scmp.eq.s32.totalorder %s18, 0
    %p180 = por %p178, %p179
    %s181 = ssub.s32 %s20, 1
    %p182 = scmp.gt.s32.totalorder %s181, 0
    %s183 = scalar_select %p182, %s181, 0
    %p184 = scmp.lt.s32.totalorder %s183, 3
    %s185 = scalar_select %p184, %s183, 3
    %s186 = ssub.s32 %s21, 1
    %p187 = scmp.gt.s32.totalorder %s186, 0
    %s188 = scalar_select %p187, %s186, 0
    %p189 = scmp.lt.s32.totalorder %s188, 5
    %s190 = scalar_select %p189, %s188, 5
    %s191 = ssub.s32 %s34, 1
    %p192 = scmp.gt.s32.totalorder %s191, 0
    %s193 = scalar_select %p192, %s191, 0
    %p194 = scmp.lt.s32.totalorder %s193, 3
    %s195 = scalar_select %p194, %s193, 3
    %s196 = ssub.s32 %s30, 1
    %p197 = scmp.gt.s32.totalorder %s196, 0
    %s198 = scalar_select %p197, %s196, 0
    %p199 = scmp.lt.s32.totalorder %s198, 5
    %s200 = scalar_select %p199, %s198, 5
    %s201 = ssub.s32 %s19, %s38
    %s202 = ssub.s32 %s185, %s195
    %s203 = sor.u32 %s201, %s202
    %s204 = ssub.s32 %s190, %s200
    %s205 = sor.u32 %s203, %s204
    %p206 = scmp.eq.s32.totalorder %s205, 0
    %s208 = sadd.s32 %s207, 1
    %s209 = scalar_select %p206, %s207, %s208
    %p212 = pneg %p206
    %p213 = scmp.eq.s32.totalorder %s12, 69
    %p214 = por %p212, %p213
    %p215 = scmp.ne.s32.totalorder %s207, %s210
    %p216 = scmp.eq.s32.totalorder %s12, 0
    %p217 = por %p215, %p216
    %p218 = scmp.ne.s32.totalorder %s207, %s210
    %p219 = scmp.eq.s32.totalorder %s17, 69
    %p220 = por %p218, %p219
    %p221 = scmp.ne.s32.totalorder %s210, %s211
    %p222 = scmp.eq.s32.totalorder %s17, 0
    %p223 = por %p221, %p222
    %p224 = scmp.ne.s32.totalorder %s210, %s211
    %p225 = scmp.eq.s32.totalorder %s18, 69
    %p226 = por %p224, %p225
    %p228 = scmp.ne.s32.totalorder %s211, %s227
    %p229 = scmp.eq.s32.totalorder %s18, 0
    %p230 = por %p228, %p229
    %s232 = sadd.s32 %s231, 1
    %p235 = scmp.eq.s32.totalorder %s12, 69
    %p236 = scmp.ne.s32.totalorder %s231, %s233
    %p237 = scmp.eq.s32.totalorder %s12, 0
    %p238 = por %p236, %p237
    %p239 = scmp.ne.s32.totalorder %s231, %s233
    %p240 = scmp.eq.s32.totalorder %s17, 69
    %p241 = por %p239, %p240
    %p242 = scmp.ne.s32.totalorder %s233, %s234
    %p243 = scmp.eq.s32.totalorder %s17, 0
    %p244 = por %p242, %p243
    %p245 = scmp.ne.s32.totalorder %s233, %s234
    %p246 = scmp.eq.s32.totalorder %s18, 69
    %p247 = por %p245, %p246
    %p249 = scmp.ne.s32.totalorder %s234, %s248
    %p250 = scmp.eq.s32.totalorder %s18, 0
    %p251 = por %p249, %p250
    %s253 = sadd.s32 %s252, 1
    %p256 = scmp.eq.s32.totalorder %s12, 69
    %p257 = scmp.ne.s32.totalorder %s252, %s254
    %p258 = scmp.eq.s32.totalorder %s12, 0
    %p259 = por %p257, %p258
    %p260 = scmp.ne.s32.totalorder %s252, %s254
    %p261 = scmp.eq.s32.totalorder %s17, 69
    %p262 = por %p260, %p261
    %p263 = scmp.ne.s32.totalorder %s254, %s255
    %p264 = scmp.eq.s32.totalorder %s17, 0
    %p265 = por %p263, %p264
    %p266 = scmp.ne.s32.totalorder %s254, %s255
    %p267 = scmp.eq.s32.totalorder %s18, 69
    %p268 = por %p266, %p267
    %p270 = scmp.ne.s32.totalorder %s255, %s269
    %p271 = scmp.eq.s32.totalorder %s18, 0
    %p272 = por %p270, %p271
    %s273 = ssub.s32 %s19, %s38
    %s274 = ssub.s32 %s20, %s34
    %s275 = sor.u32 %s273, %s274
    %s276 = ssub.s32 %s21, %s30
    %s277 = sor.u32 %s275, %s276
    %p278 = scmp.eq.s32.totalorder %s277, 0
    %s280 = sadd.s32 %s279, 1
    %s281 = scalar_select %p278, %s279, %s280
    %p284 = pneg %p278
    %p285 = scmp.eq.s32.totalorder %s12, 69
    %p286 = por %p284, %p285
    %p287 = scmp.ne.s32.totalorder %s279, %s282
    %p288 = scmp.eq.s32.totalorder %s12, 0
    %p289 = por %p287, %p288
    %p290 = scmp.ne.s32.totalorder %s279, %s282
    %p291 = scmp.eq.s32.totalorder %s17, 69
    %p292 = por %p290, %p291
    %p293 = scmp.ne.s32.totalorder %s282, %s283
    %p294 = scmp.eq.s32.totalorder %s17, 0
    %p295 = por %p293, %p294
    %p296 = scmp.ne.s32.totalorder %s282, %s283
    %p297 = scmp.eq.s32.totalorder %s18, 69
    %p298 = por %p296, %p297
    %p300 = scmp.ne.s32.totalorder %s283, %s299
    %p301 = scmp.eq.s32.totalorder %s18, 0
    %p302 = por %p300, %p301
    %p303 = scmp.le.s32.totalorder 1, %s12
    %p304 = scmp.lt.s32.totalorder %s12, 71
    %p305 = pnand %p303, %p304
    %p306 = pneg %p305
    // Predicated region
    $region9: #{conv_transpose3d_leaky.1} parent=5 // pred_check
      _
    $region10: #{conv_transpose3d_leaky.1} parent=5 // pred_check_branch
      %308 = sbr.rel (%p305) target = $region12
    $region11: #{conv_transpose3d_leaky.1} parent=5 // pred_region
      %s309 = ssub.s32 %s12, 1
      // Predicated region
      $region13: #{conv_transpose3d_leaky.1} parent=11 // pred_check
        %p310 = pneg %p244
      $region14: #{conv_transpose3d_leaky.1} parent=11 // pred_check_branch
        %312 = sbr.rel (%p310) target = $region16
      $region15: #{conv_transpose3d_leaky.1} parent=11 // pred_region
        _
      $region16: #{conv_transpose3d_leaky.1} parent=11 // pred_fallthru
        _
      // Predicated region
      $region17: #{conv_transpose3d_leaky.1} parent=11 // pred_check
        %p313 = pneg %p265
      $region18: #{conv_transpose3d_leaky.1} parent=11 // pred_check_branch
        %315 = sbr.rel (%p313) target = $region20
      $region19: #{conv_transpose3d_leaky.1} parent=11 // pred_region
        _
      $region20: #{conv_transpose3d_leaky.1} parent=11 // pred_fallthru
        _
    $region12: #{conv_transpose3d_leaky.1} parent=5 // pred_fallthru
      _
    %p316 = scmp.lt.s32.totalorder %s12, 70
    // Predicated region
    $region21: #{conv_transpose3d_leaky.1} parent=5 // pred_check
      %p317 = pneg %p316
    $region22: #{conv_transpose3d_leaky.1} parent=5 // pred_check_branch
      %319 = sbr.rel (%p317) target = $region24
    $region23: #{conv_transpose3d_leaky.1} parent=5 // pred_region
      // Predicated region
      $region25: #{conv_transpose3d_leaky.1} parent=23 // pred_check
        %p320 = pneg %p71
      $region26: #{conv_transpose3d_leaky.1} parent=23 // pred_check_branch
        %322 = sbr.rel (%p320) target = $region28
      $region27: #{conv_transpose3d_leaky.1} parent=23 // pred_region
        %p323 = scmp.gt.s32.totalorder %s20, 0
        %s324 = scalar_select %p323, %s20, 0
        %p325 = scmp.lt.s32.totalorder %s324, 3
        %s326 = scalar_select %p325, %s324, 3
        %p327 = scmp.gt.s32.totalorder %s21, 0
        %s328 = scalar_select %p327, %s21, 0
        %p329 = scmp.lt.s32.totalorder %s328, 5
        %s330 = scalar_select %p329, %s328, 5
        %p331 = scmp.lt.s32.totalorder %s19, 1
        %s332 = scalar_select %p331, %s19, 1
        %p333 = scmp.lt.s32.totalorder %s326, 3
        %s334 = scalar_select %p333, %s326, 3
        %p335 = scmp.lt.s32.totalorder %s330, 5
        %s336 = scalar_select %p335, %s330, 5
        %s337 = smul.addr %s334, 6
        %s338 = sadd.s32 %s336, %s337
        %s339 = smul.addr %s332, 24
        %s340 = sadd.s32 %s338, %s339
        %s341 = smul.addr %s340, 4
        %s342 = scalar_lea.vmem %s0, %s341
        %p343 = scmp.gt.s32.totalorder %s20, 0
        %s344 = scalar_select %p343, %s20, 0
        %p345 = scmp.lt.s32.totalorder %s344, 3
        %s346 = scalar_select %p345, %s344, 3
        %p347 = scmp.gt.s32.totalorder %s21, 0
        %s348 = scalar_select %p347, %s21, 0
        %p349 = scmp.lt.s32.totalorder %s348, 5
        %s350 = scalar_select %p349, %s348, 5
      $region28: #{conv_transpose3d_leaky.1} parent=23 // pred_fallthru
        _
      // Predicated region
      $region29: #{conv_transpose3d_leaky.1} parent=23 // pred_check
        %p351 = pneg %p119
      $region30: #{conv_transpose3d_leaky.1} parent=23 // pred_check_branch
        %353 = sbr.rel (%p351) target = $region32
      $region31: #{conv_transpose3d_leaky.1} parent=23 // pred_region
        %p354 = scmp.gt.s32.totalorder %s20, 0
        %s355 = scalar_select %p354, %s20, 0
        %p356 = scmp.lt.s32.totalorder %s355, 3
        %s357 = scalar_select %p356, %s355, 3
        %s358 = ssub.s32 %s21, 1
        %p359 = scmp.gt.s32.totalorder %s358, 0
        %s360 = scalar_select %p359, %s358, 0
        %p361 = scmp.lt.s32.totalorder %s360, 5
        %s362 = scalar_select %p361, %s360, 5
        %p363 = scmp.lt.s32.totalorder %s19, 1
        %s364 = scalar_select %p363, %s19, 1
        %p365 = scmp.lt.s32.totalorder %s357, 3
        %s366 = scalar_select %p365, %s357, 3
        %p367 = scmp.lt.s32.totalorder %s362, 5
        %s368 = scalar_select %p367, %s362, 5
        %s369 = smul.addr %s366, 6
        %s370 = sadd.s32 %s368, %s369
        %s371 = smul.addr %s364, 24
        %s372 = sadd.s32 %s370, %s371
        %s373 = smul.addr %s372, 4
        %s374 = scalar_lea.vmem %s1, %s373
        %p375 = scmp.gt.s32.totalorder %s20, 0
        %s376 = scalar_select %p375, %s20, 0
        %p377 = scmp.lt.s32.totalorder %s376, 3
        %s378 = scalar_select %p377, %s376, 3
        %s379 = ssub.s32 %s21, 1
        %p380 = scmp.gt.s32.totalorder %s379, 0
        %s381 = scalar_select %p380, %s379, 0
        %p382 = scmp.lt.s32.totalorder %s381, 5
        %s383 = scalar_select %p382, %s381, 5
      $region32: #{conv_transpose3d_leaky.1} parent=23 // pred_fallthru
        _
      // Predicated region
      $region33: #{conv_transpose3d_leaky.1} parent=23 // pred_check
        %p384 = pneg %p167
      $region34: #{conv_transpose3d_leaky.1} parent=23 // pred_check_branch
        %386 = sbr.rel (%p384) target = $region36
      $region35: #{conv_transpose3d_leaky.1} parent=23 // pred_region
        %s387 = ssub.s32 %s20, 1
        %p388 = scmp.gt.s32.totalorder %s387, 0
        %s389 = scalar_select %p388, %s387, 0
        %p390 = scmp.lt.s32.totalorder %s389, 3
        %s391 = scalar_select %p390, %s389, 3
        %p392 = scmp.gt.s32.totalorder %s21, 0
        %s393 = scalar_select %p392, %s21, 0
        %p394 = scmp.lt.s32.totalorder %s393, 5
        %s395 = scalar_select %p394, %s393, 5
        %p396 = scmp.lt.s32.totalorder %s19, 1
        %s397 = scalar_select %p396, %s19, 1
        %p398 = scmp.lt.s32.totalorder %s391, 3
        %s399 = scalar_select %p398, %s391, 3
        %p400 = scmp.lt.s32.totalorder %s395, 5
        %s401 = scalar_select %p400, %s395, 5
        %s402 = smul.addr %s399, 6
        %s403 = sadd.s32 %s401, %s402
        %s404 = smul.addr %s397, 24
        %s405 = sadd.s32 %s403, %s404
        %s406 = smul.addr %s405, 4
        %s407 = scalar_lea.vmem %s2, %s406
        %s408 = ssub.s32 %s20, 1
        %p409 = scmp.gt.s32.totalorder %s408, 0
        %s410 = scalar_select %p409, %s408, 0
        %p411 = scmp.lt.s32.totalorder %s410, 3
        %s412 = scalar_select %p411, %s410, 3
        %p413 = scmp.gt.s32.totalorder %s21, 0
        %s414 = scalar_select %p413, %s21, 0
        %p415 = scmp.lt.s32.totalorder %s414, 5
        %s416 = scalar_select %p415, %s414, 5
      $region36: #{conv_transpose3d_leaky.1} parent=23 // pred_fallthru
        _
      // Predicated region
      $region37: #{conv_transpose3d_leaky.1} parent=23 // pred_check
        %p417 = pneg %p217
      $region38: #{conv_transpose3d_leaky.1} parent=23 // pred_check_branch
        %419 = sbr.rel (%p417) target = $region40
      $region39: #{conv_transpose3d_leaky.1} parent=23 // pred_region
        %s420 = ssub.s32 %s20, 1
        %p421 = scmp.gt.s32.totalorder %s420, 0
        %s422 = scalar_select %p421, %s420, 0
        %p423 = scmp.lt.s32.totalorder %s422, 3
        %s424 = scalar_select %p423, %s422, 3
        %s425 = ssub.s32 %s21, 1
        %p426 = scmp.gt.s32.totalorder %s425, 0
        %s427 = scalar_select %p426, %s425, 0
        %p428 = scmp.lt.s32.totalorder %s427, 5
        %s429 = scalar_select %p428, %s427, 5
        %p430 = scmp.lt.s32.totalorder %s19, 1
        %s431 = scalar_select %p430, %s19, 1
        %p432 = scmp.lt.s32.totalorder %s424, 3
        %s433 = scalar_select %p432, %s424, 3
        %p434 = scmp.lt.s32.totalorder %s429, 5
        %s435 = scalar_select %p434, %s429, 5
        %s436 = smul.addr %s433, 6
        %s437 = sadd.s32 %s435, %s436
        %s438 = smul.addr %s431, 24
        %s439 = sadd.s32 %s437, %s438
        %s440 = smul.addr %s439, 4
        %s441 = scalar_lea.vmem %s3, %s440
        %s442 = ssub.s32 %s20, 1
        %p443 = scmp.gt.s32.totalorder %s442, 0
        %s444 = scalar_select %p443, %s442, 0
        %p445 = scmp.lt.s32.totalorder %s444, 3
        %s446 = scalar_select %p445, %s444, 3
        %s447 = ssub.s32 %s21, 1
        %p448 = scmp.gt.s32.totalorder %s447, 0
        %s449 = scalar_select %p448, %s447, 0
        %p450 = scmp.lt.s32.totalorder %s449, 5
        %s451 = scalar_select %p450, %s449, 5
      $region40: #{conv_transpose3d_leaky.1} parent=23 // pred_fallthru
        _
    $region24: #{conv_transpose3d_leaky.1} parent=5 // pred_fallthru
      _
    %p452 = scmp.le.s32.totalorder 1, %s12
    %p453 = scmp.lt.s32.totalorder %s12, 71
    %p454 = pnand %p452, %p453
    %p455 = pneg %p454
    // Predicated region
    $region41: #{conv_transpose3d_leaky.1} parent=5 // pred_check
      _
    $region42: #{conv_transpose3d_leaky.1} parent=5 // pred_check_branch
      %457 = sbr.rel (%p454) target = $region44
    $region43: #{conv_transpose3d_leaky.1} parent=5 // pred_region
      %s458 = ssub.s32 %s12, 1
      %p459 = scmp.gt.s32.totalorder %s23, 0
      %s460 = scalar_select %p459, %s23, 0
      %p461 = scmp.lt.s32.totalorder %s460, 3
      %s462 = scalar_select %p461, %s460, 3
      %p463 = scmp.gt.s32.totalorder %s24, 0
      %s464 = scalar_select %p463, %s24, 0
      %p465 = scmp.lt.s32.totalorder %s464, 5
      %s466 = scalar_select %p465, %s464, 5
      %p467 = scmp.lt.s32.totalorder %s22, 1
      %s468 = scalar_select %p467, %s22, 1
      %p469 = scmp.lt.s32.totalorder %s462, 3
      %s470 = scalar_select %p469, %s462, 3
      %p471 = scmp.lt.s32.totalorder %s466, 5
      %s472 = scalar_select %p471, %s466, 5
      %s473 = smul.addr %s470, 6
      %s474 = sadd.s32 %s472, %s473
      %s475 = smul.addr %s468, 24
      %s476 = sadd.s32 %s474, %s475
      %s477 = smul.addr %s476, 4
      %s478 = scalar_lea.vmem %s0, %s477
      %p479 = pneg %p77
      %p480 = pneg %p74
      %p481 = scmp.gt.s32.totalorder %s23, 0
      %s482 = scalar_select %p481, %s23, 0
      %p483 = scmp.lt.s32.totalorder %s482, 3
      %s484 = scalar_select %p483, %s482, 3
      %s485 = ssub.s32 %s24, 1
      %p486 = scmp.gt.s32.totalorder %s485, 0
      %s487 = scalar_select %p486, %s485, 0
      %p488 = scmp.lt.s32.totalorder %s487, 5
      %s489 = scalar_select %p488, %s487, 5
      %p490 = scmp.lt.s32.totalorder %s22, 1
      %s491 = scalar_select %p490, %s22, 1
      %p492 = scmp.lt.s32.totalorder %s484, 3
      %s493 = scalar_select %p492, %s484, 3
      %p494 = scmp.lt.s32.totalorder %s489, 5
      %s495 = scalar_select %p494, %s489, 5
      %s496 = smul.addr %s493, 6
      %s497 = sadd.s32 %s495, %s496
      %s498 = smul.addr %s491, 24
      %s499 = sadd.s32 %s497, %s498
      %s500 = smul.addr %s499, 4
      %s501 = scalar_lea.vmem %s1, %s500
      %p502 = pneg %p125
      %p503 = pneg %p122
      %s504 = ssub.s32 %s23, 1
      %p505 = scmp.gt.s32.totalorder %s504, 0
      %s506 = scalar_select %p505, %s504, 0
      %p507 = scmp.lt.s32.totalorder %s506, 3
      %s508 = scalar_select %p507, %s506, 3
      %p509 = scmp.gt.s32.totalorder %s24, 0
      %s510 = scalar_select %p509, %s24, 0
      %p511 = scmp.lt.s32.totalorder %s510, 5
      %s512 = scalar_select %p511, %s510, 5
      %p513 = scmp.lt.s32.totalorder %s22, 1
      %s514 = scalar_select %p513, %s22, 1
      %p515 = scmp.lt.s32.totalorder %s508, 3
      %s516 = scalar_select %p515, %s508, 3
      %p517 = scmp.lt.s32.totalorder %s512, 5
      %s518 = scalar_select %p517, %s512, 5
      %s519 = smul.addr %s516, 6
      %s520 = sadd.s32 %s518, %s519
      %s521 = smul.addr %s514, 24
      %s522 = sadd.s32 %s520, %s521
      %s523 = smul.addr %s522, 4
      %s524 = scalar_lea.vmem %s2, %s523
      %p525 = pneg %p173
      %p526 = pneg %p170
      %s527 = ssub.s32 %s23, 1
      %p528 = scmp.gt.s32.totalorder %s527, 0
      %s529 = scalar_select %p528, %s527, 0
      %p530 = scmp.lt.s32.totalorder %s529, 3
      %s531 = scalar_select %p530, %s529, 3
      %s532 = ssub.s32 %s24, 1
      %p533 = scmp.gt.s32.totalorder %s532, 0
      %s534 = scalar_select %p533, %s532, 0
      %p535 = scmp.lt.s32.totalorder %s534, 5
      %s536 = scalar_select %p535, %s534, 5
      %p537 = scmp.lt.s32.totalorder %s22, 1
      %s538 = scalar_select %p537, %s22, 1
      %p539 = scmp.lt.s32.totalorder %s531, 3
      %s540 = scalar_select %p539, %s531, 3
      %p541 = scmp.lt.s32.totalorder %s536, 5
      %s542 = scalar_select %p541, %s536, 5
      %s543 = smul.addr %s540, 6
      %s544 = sadd.s32 %s542, %s543
      %s545 = smul.addr %s538, 24
      %s546 = sadd.s32 %s544, %s545
      %s547 = smul.addr %s546, 4
      %s548 = scalar_lea.vmem %s3, %s547
      %p549 = pneg %p223
      %p550 = pneg %p220
      %p551 = pneg %p244
      %p552 = pneg %p241
      %p553 = pneg %p265
      %p554 = pneg %p262
      %p555 = pneg %p295
      %p556 = pneg %p292
      %p557 = scmp.lt.s32.totalorder %s22, 1
      %s558 = scalar_select %p557, %s22, 1
      %p559 = scmp.lt.s32.totalorder %s23, 4
      %s560 = scalar_select %p559, %s23, 4
      %p561 = scmp.lt.s32.totalorder %s24, 6
      %s562 = scalar_select %p561, %s24, 6
      %s563 = smul.addr %s560, 7
      %s564 = sadd.s32 %s562, %s563
      %s565 = smul.addr %s558, 35
      %s566 = sadd.s32 %s564, %s565
      %s567 = smul.addr %s566, 8
      %s568 = scalar_lea.vmem %s6, %s567
      %p569 = scmp.gt.s32.totalorder %s23, 0
      %s570 = scalar_select %p569, %s23, 0
      %p571 = scmp.lt.s32.totalorder %s570, 3
      %s572 = scalar_select %p571, %s570, 3
      %p573 = scmp.gt.s32.totalorder %s24, 0
      %s574 = scalar_select %p573, %s24, 0
      %p575 = scmp.lt.s32.totalorder %s574, 5
      %s576 = scalar_select %p575, %s574, 5
      %p577 = scmp.lt.s32.totalorder %s22, 1
      %s578 = scalar_select %p577, %s22, 1
      %p579 = scmp.lt.s32.totalorder %s572, 3
      %s580 = scalar_select %p579, %s572, 3
      %p581 = scmp.lt.s32.totalorder %s576, 5
      %s582 = scalar_select %p581, %s576, 5
      %s583 = smul.addr %s580, 6
      %s584 = sadd.s32 %s582, %s583
      %s585 = smul.addr %s578, 24
      %s586 = sadd.s32 %s584, %s585
      %s587 = smul.addr %s586, 4
      %s588 = scalar_lea.vmem %s0, %s587
      %p589 = scmp.gt.s32.totalorder %s23, 0
      %s590 = scalar_select %p589, %s23, 0
      %p591 = scmp.lt.s32.totalorder %s590, 3
      %s592 = scalar_select %p591, %s590, 3
      %p593 = scmp.gt.s32.totalorder %s24, 0
      %s594 = scalar_select %p593, %s24, 0
      %p595 = scmp.lt.s32.totalorder %s594, 5
      %s596 = scalar_select %p595, %s594, 5
      %p597 = scmp.gt.s32.totalorder %s23, 0
      %s598 = scalar_select %p597, %s23, 0
      %p599 = scmp.lt.s32.totalorder %s598, 3
      %s600 = scalar_select %p599, %s598, 3
      %s601 = ssub.s32 %s24, 1
      %p602 = scmp.gt.s32.totalorder %s601, 0
      %s603 = scalar_select %p602, %s601, 0
      %p604 = scmp.lt.s32.totalorder %s603, 5
      %s605 = scalar_select %p604, %s603, 5
      %p606 = scmp.lt.s32.totalorder %s22, 1
      %s607 = scalar_select %p606, %s22, 1
      %p608 = scmp.lt.s32.totalorder %s600, 3
      %s609 = scalar_select %p608, %s600, 3
      %p610 = scmp.lt.s32.totalorder %s605, 5
      %s611 = scalar_select %p610, %s605, 5
      %s612 = smul.addr %s609, 6
      %s613 = sadd.s32 %s611, %s612
      %s614 = smul.addr %s607, 24
      %s615 = sadd.s32 %s613, %s614
      %s616 = smul.addr %s615, 4
      %s617 = scalar_lea.vmem %s1, %s616
      %p618 = scmp.gt.s32.totalorder %s23, 0
      %s619 = scalar_select %p618, %s23, 0
      %p620 = scmp.lt.s32.totalorder %s619, 3
      %s621 = scalar_select %p620, %s619, 3
      %s622 = ssub.s32 %s24, 1
      %p623 = scmp.gt.s32.totalorder %s622, 0
      %s624 = scalar_select %p623, %s622, 0
      %p625 = scmp.lt.s32.totalorder %s624, 5
      %s626 = scalar_select %p625, %s624, 5
      %s627 = ssub.s32 %s23, 1
      %p628 = scmp.gt.s32.totalorder %s627, 0
      %s629 = scalar_select %p628, %s627, 0
      %p630 = scmp.lt.s32.totalorder %s629, 3
      %s631 = scalar_select %p630, %s629, 3
      %p632 = scmp.gt.s32.totalorder %s24, 0
      %s633 = scalar_select %p632, %s24, 0
      %p634 = scmp.lt.s32.totalorder %s633, 5
      %s635 = scalar_select %p634, %s633, 5
      %p636 = scmp.lt.s32.totalorder %s22, 1
      %s637 = scalar_select %p636, %s22, 1
      %p638 = scmp.lt.s32.totalorder %s631, 3
      %s639 = scalar_select %p638, %s631, 3
      %p640 = scmp.lt.s32.totalorder %s635, 5
      %s641 = scalar_select %p640, %s635, 5
      %s642 = smul.addr %s639, 6
      %s643 = sadd.s32 %s641, %s642
      %s644 = smul.addr %s637, 24
      %s645 = sadd.s32 %s643, %s644
      %s646 = smul.addr %s645, 4
      %s647 = scalar_lea.vmem %s2, %s646
      %s648 = ssub.s32 %s23, 1
      %p649 = scmp.gt.s32.totalorder %s648, 0
      %s650 = scalar_select %p649, %s648, 0
      %p651 = scmp.lt.s32.totalorder %s650, 3
      %s652 = scalar_select %p651, %s650, 3
      %p653 = scmp.gt.s32.totalorder %s24, 0
      %s654 = scalar_select %p653, %s24, 0
      %p655 = scmp.lt.s32.totalorder %s654, 5
      %s656 = scalar_select %p655, %s654, 5
      %s657 = ssub.s32 %s23, 1
      %p658 = scmp.gt.s32.totalorder %s657, 0
      %s659 = scalar_select %p658, %s657, 0
      %p660 = scmp.lt.s32.totalorder %s659, 3
      %s661 = scalar_select %p660, %s659, 3
      %s662 = ssub.s32 %s24, 1
      %p663 = scmp.gt.s32.totalorder %s662, 0
      %s664 = scalar_select %p663, %s662, 0
      %p665 = scmp.lt.s32.totalorder %s664, 5
      %s666 = scalar_select %p665, %s664, 5
      %p667 = scmp.lt.s32.totalorder %s22, 1
      %s668 = scalar_select %p667, %s22, 1
      %p669 = scmp.lt.s32.totalorder %s661, 3
      %s670 = scalar_select %p669, %s661, 3
      %p671 = scmp.lt.s32.totalorder %s666, 5
      %s672 = scalar_select %p671, %s666, 5
      %s673 = smul.addr %s670, 6
      %s674 = sadd.s32 %s672, %s673
      %s675 = smul.addr %s668, 24
      %s676 = sadd.s32 %s674, %s675
      %s677 = smul.addr %s676, 4
      %s678 = scalar_lea.vmem %s3, %s677
      %s679 = ssub.s32 %s23, 1
      %p680 = scmp.gt.s32.totalorder %s679, 0
      %s681 = scalar_select %p680, %s679, 0
      %p682 = scmp.lt.s32.totalorder %s681, 3
      %s683 = scalar_select %p682, %s681, 3
      %s684 = ssub.s32 %s24, 1
      %p685 = scmp.gt.s32.totalorder %s684, 0
      %s686 = scalar_select %p685, %s684, 0
      %p687 = scmp.lt.s32.totalorder %s686, 5
      %s688 = scalar_select %p687, %s686, 5
      %p689 = scmp.lt.s32.totalorder %s22, 1
      %s690 = scalar_select %p689, %s22, 1
      %p691 = scmp.lt.s32.totalorder %s23, 4
      %s692 = scalar_select %p691, %s23, 4
      %p693 = scmp.lt.s32.totalorder %s24, 6
      %s694 = scalar_select %p693, %s24, 6
      %s695 = smul.addr %s692, 7
      %s696 = sadd.s32 %s694, %s695
      %s697 = smul.addr %s690, 35
      %s698 = sadd.s32 %s696, %s697
      %s699 = smul.addr %s698, 8
      %s700 = scalar_lea.vmem %s6, %s699
      %vm702 = vcmask 332800
      %703 = vst.msk [vmem:[#allocation2] sm:$0x3f] %vm702, 0.0
      %p704 = scmp.lt.s32.totalorder %s23, 4
      %p705 = scmp.lt.s32.totalorder %s24, 6
      %p706 = pnand %p704, %p705
      %p707 = pneg %p706
      // Predicated region
      $region45: #{conv_transpose3d_leaky.1} parent=43 // pred_check
        _
      $region46: #{conv_transpose3d_leaky.1} parent=43 // pred_check_branch
        %709 = sbr.rel (%p706) target = $region48
      $region47: #{conv_transpose3d_leaky.1} parent=43 // pred_region
        %v710 = vld [vmem:[%s588] sm:$0x7]
        %v711 = vld [vmem:[%s4] sm:$0xf]
        %v712 = vld [vmem:[%s4 + $0x4] sm:$0x7]
        %v715 = vunpack.c.l.b16 %v711
        %v716 = vunpack.c.l.b16 %v712
        %v717 = vpack.c.b16 %v716, %v715
        %vm718 = vcmask 113664
        %v720 = vsel %vm718, %v710, 0
        %vm722 = vcmask 1046528
        %v724 = vsel %vm722, %v717, 0
        %726 = vmatpush.bf16.msra.mxu0 0
        %727 = vmatpush.bf16.msra.mxu0 0
        %728 = vmatpush.bf16.msra.mxu0 0
        %729 = vmatpush.bf16.msra.mxu0 0
        %730 = vmatpush.bf16.msra.mxu0 0
        %731 = vmatpush.bf16.msra.mxu0 0
        %732 = vmatpush.bf16.msra.mxu0 0
        %733 = vmatpush.bf16.msra.mxu0 %v724
        %734 = vmatmul.bf16.gmra.mxu0 %v720
        %v735 = vpop.f32.mrf.mxu0
        %v736 = vadd.f32 0.0, %v735
        %v737 = vpop.f32.mrf.mxu0
        %738 = vdwg.mxu0
        %v739 = vld [vmem:[#allocation2] sm:$0x1f]
        %v740 = vadd.f32 %v739, %v736
        %vm741 = vcmask 331776
        %742 = vst.msk [vmem:[#allocation2] sm:$0x1f] %vm741, %v740
        %s743 = scalar_lea.vmem %s4, 8
        %v744 = vld [vmem:[%s743] sm:$0xf]
        %v745 = vld [vmem:[%s743 + $0x4] sm:$0x7]
        %v748 = vunpack.c.l.b16 %v744
        %v749 = vunpack.c.l.b16 %v745
        %v750 = vpack.c.b16 %v749, %v748
        %v752 = vsel %vm722, %v750, 0
        %754 = vmatpush.bf16.msra.mxu0 0
        %755 = vmatpush.bf16.msra.mxu0 0
        %756 = vmatpush.bf16.msra.mxu0 0
        %757 = vmatpush.bf16.msra.mxu0 0
        %758 = vmatpush.bf16.msra.mxu0 0
        %759 = vmatpush.bf16.msra.mxu0 0
        %760 = vmatpush.bf16.msra.mxu0 0
        %761 = vmatpush.bf16.msra.mxu0 %v752
        %762 = vmatmul.bf16.gmra.mxu0 %v720
        %v763 = vpop.f32.mrf.mxu0
        %v764 = vadd.f32 0.0, %v763
        %v765 = vpop.f32.mrf.mxu0
        %766 = vdwg.mxu0
        %v767 = vld [vmem:[#allocation2 + $0x1] sm:$0x1f]
        %v768 = vadd.f32 %v767, %v764
        %769 = vst.msk [vmem:[#allocation2 + $0x1] sm:$0x1f] %vm741, %v768
      $region48: #{conv_transpose3d_leaky.1} parent=43 // pred_fallthru
        _
      %p770 = scmp.ge.s32.totalorder %s24, 1
      %p771 = pnand %p704, %p770
      %p772 = pneg %p771
      // Predicated region
      $region49: #{conv_transpose3d_leaky.1} parent=43 // pred_check
        _
      $region50: #{conv_transpose3d_leaky.1} parent=43 // pred_check_branch
        %774 = sbr.rel (%p771) target = $region52
      $region51: #{conv_transpose3d_leaky.1} parent=43 // pred_region
        %v775 = vld [vmem:[%s617] sm:$0x7]
        %s776 = scalar_lea.vmem %s4, 16
        %v777 = vld [vmem:[%s776] sm:$0xf]
        %v778 = vld [vmem:[%s776 + $0x4] sm:$0x7]
        %v781 = vunpack.c.l.b16 %v777
        %v782 = vunpack.c.l.b16 %v778
        %v783 = vpack.c.b16 %v782, %v781
        %vm784 = vcmask 113664
        %v786 = vsel %vm784, %v775, 0
        %vm788 = vcmask 1046528
        %v790 = vsel %vm788, %v783, 0
        %792 = vmatpush.bf16.msra.mxu0 0
        %793 = vmatpush.bf16.msra.mxu0 0
        %794 = vmatpush.bf16.msra.mxu0 0
        %795 = vmatpush.bf16.msra.mxu0 0
        %796 = vmatpush.bf16.msra.mxu0 0
        %797 = vmatpush.bf16.msra.mxu0 0
        %798 = vmatpush.bf16.msra.mxu0 0
        %799 = vmatpush.bf16.msra.mxu0 %v790
        %800 = vmatmul.bf16.gmra.mxu0 %v786
        %v801 = vpop.f32.mrf.mxu0
        %v802 = vadd.f32 0.0, %v801
        %v803 = vpop.f32.mrf.mxu0
        %804 = vdwg.mxu0
        %v805 = vld [vmem:[#allocation2] sm:$0x1f]
        %v806 = vadd.f32 %v805, %v802
        %vm807 = vcmask 331776
        %808 = vst.msk [vmem:[#allocation2] sm:$0x1f] %vm807, %v806
        %s809 = scalar_lea.vmem %s4, 24
        %v810 = vld [vmem:[%s809] sm:$0xf]
        %v811 = vld [vmem:[%s809 + $0x4] sm:$0x7]
        %v814 = vunpack.c.l.b16 %v810
        %v815 = vunpack.c.l.b16 %v811
        %v816 = vpack.c.b16 %v815, %v814
        %v818 = vsel %vm788, %v816, 0
        %820 = vmatpush.bf16.msra.mxu0 0
        %821 = vmatpush.bf16.msra.mxu0 0
        %822 = vmatpush.bf16.msra.mxu0 0
        %823 = vmatpush.bf16.msra.mxu0 0
        %824 = vmatpush.bf16.msra.mxu0 0
        %825 = vmatpush.bf16.msra.mxu0 0
        %826 = vmatpush.bf16.msra.mxu0 0
        %827 = vmatpush.bf16.msra.mxu0 %v818
        %828 = vmatmul.bf16.gmra.mxu0 %v786
        %v829 = vpop.f32.mrf.mxu0
        %v830 = vadd.f32 0.0, %v829
        %v831 = vpop.f32.mrf.mxu0
        %832 = vdwg.mxu0
        %v833 = vld [vmem:[#allocation2 + $0x1] sm:$0x1f]
        %v834 = vadd.f32 %v833, %v830
        %835 = vst.msk [vmem:[#allocation2 + $0x1] sm:$0x1f] %vm807, %v834
      $region52: #{conv_transpose3d_leaky.1} parent=43 // pred_fallthru
        _
      %p836 = scmp.ge.s32.totalorder %s23, 1
      %p837 = pnand %p836, %p705
      %p838 = pneg %p837
      // Predicated region
      $region53: #{conv_transpose3d_leaky.1} parent=43 // pred_check
        _
      $region54: #{conv_transpose3d_leaky.1} parent=43 // pred_check_branch
        %840 = sbr.rel (%p837) target = $region56
      $region55: #{conv_transpose3d_leaky.1} parent=43 // pred_region
        %v841 = vld [vmem:[%s647] sm:$0x7]
        %s842 = scalar_lea.vmem %s4, 32
        %v843 = vld [vmem:[%s842] sm:$0xf]
        %v844 = vld [vmem:[%s842 + $0x4] sm:$0x7]
        %v847 = vunpack.c.l.b16 %v843
        %v848 = vunpack.c.l.b16 %v844
        %v849 = vpack.c.b16 %v848, %v847
        %vm850 = vcmask 113664
        %v852 = vsel %vm850, %v841, 0
        %vm854 = vcmask 1046528
        %v856 = vsel %vm854, %v849, 0
        %858 = vmatpush.bf16.msra.mxu0 0
        %859 = vmatpush.bf16.msra.mxu0 0
        %860 = vmatpush.bf16.msra.mxu0 0
        %861 = vmatpush.bf16.msra.mxu0 0
        %862 = vmatpush.bf16.msra.mxu0 0
        %863 = vmatpush.bf16.msra.mxu0 0
        %864 = vmatpush.bf16.msra.mxu0 0
        %865 = vmatpush.bf16.msra.mxu0 %v856
        %866 = vmatmul.bf16.gmra.mxu0 %v852
        %v867 = vpop.f32.mrf.mxu0
        %v868 = vadd.f32 0.0, %v867
        %v869 = vpop.f32.mrf.mxu0
        %870 = vdwg.mxu0
        %v871 = vld [vmem:[#allocation2] sm:$0x1f]
        %v872 = vadd.f32 %v871, %v868
        %vm873 = vcmask 331776
        %874 = vst.msk [vmem:[#allocation2] sm:$0x1f] %vm873, %v872
        %s875 = scalar_lea.vmem %s4, 40
        %v876 = vld [vmem:[%s875] sm:$0xf]
        %v877 = vld [vmem:[%s875 + $0x4] sm:$0x7]
        %v880 = vunpack.c.l.b16 %v876
        %v881 = vunpack.c.l.b16 %v877
        %v882 = vpack.c.b16 %v881, %v880
        %v884 = vsel %vm854, %v882, 0
        %886 = vmatpush.bf16.msra.mxu0 0
        %887 = vmatpush.bf16.msra.mxu0 0
        %888 = vmatpush.bf16.msra.mxu0 0
        %889 = vmatpush.bf16.msra.mxu0 0
        %890 = vmatpush.bf16.msra.mxu0 0
        %891 = vmatpush.bf16.msra.mxu0 0
        %892 = vmatpush.bf16.msra.mxu0 0
        %893 = vmatpush.bf16.msra.mxu0 %v884
        %894 = vmatmul.bf16.gmra.mxu0 %v852
        %v895 = vpop.f32.mrf.mxu0
        %v896 = vadd.f32 0.0, %v895
        %v897 = vpop.f32.mrf.mxu0
        %898 = vdwg.mxu0
        %v899 = vld [vmem:[#allocation2 + $0x1] sm:$0x1f]
        %v900 = vadd.f32 %v899, %v896
        %901 = vst.msk [vmem:[#allocation2 + $0x1] sm:$0x1f] %vm873, %v900
      $region56: #{conv_transpose3d_leaky.1} parent=43 // pred_fallthru
        _
      %p902 = pnand %p836, %p770
      %p903 = pneg %p902
      // Predicated region
      $region57: #{conv_transpose3d_leaky.1} parent=43 // pred_check
        _
      $region58: #{conv_transpose3d_leaky.1} parent=43 // pred_check_branch
        %905 = sbr.rel (%p902) target = $region60
      $region59: #{conv_transpose3d_leaky.1} parent=43 // pred_region
        %v906 = vld [vmem:[%s678] sm:$0x7]
        %s907 = scalar_lea.vmem %s4, 48
        %v908 = vld [vmem:[%s907] sm:$0xf]
        %v909 = vld [vmem:[%s907 + $0x4] sm:$0x7]
        %v912 = vunpack.c.l.b16 %v908
        %v913 = vunpack.c.l.b16 %v909
        %v914 = vpack.c.b16 %v913, %v912
        %vm915 = vcmask 113664
        %v917 = vsel %vm915, %v906, 0
        %vm919 = vcmask 1046528
        %v921 = vsel %vm919, %v914, 0
        %923 = vmatpush.bf16.msra.mxu0 0
        %924 = vmatpush.bf16.msra.mxu0 0
        %925 = vmatpush.bf16.msra.mxu0 0
        %926 = vmatpush.bf16.msra.mxu0 0
        %927 = vmatpush.bf16.msra.mxu0 0
        %928 = vmatpush.bf16.msra.mxu0 0
        %929 = vmatpush.bf16.msra.mxu0 0
        %930 = vmatpush.bf16.msra.mxu0 %v921
        %931 = vmatmul.bf16.gmra.mxu0 %v917
        %v932 = vpop.f32.mrf.mxu0
        %v933 = vadd.f32 0.0, %v932
        %v934 = vpop.f32.mrf.mxu0
        %935 = vdwg.mxu0
        %v936 = vld [vmem:[#allocation2] sm:$0x1f]
        %v937 = vadd.f32 %v936, %v933
        %vm938 = vcmask 331776
        %939 = vst.msk [vmem:[#allocation2] sm:$0x1f] %vm938, %v937
        %s940 = scalar_lea.vmem %s4, 56
        %v941 = vld [vmem:[%s940] sm:$0xf]
        %v942 = vld [vmem:[%s940 + $0x4] sm:$0x7]
        %v945 = vunpack.c.l.b16 %v941
        %v946 = vunpack.c.l.b16 %v942
        %v947 = vpack.c.b16 %v946, %v945
        %v949 = vsel %vm919, %v947, 0
        %951 = vmatpush.bf16.msra.mxu0 0
        %952 = vmatpush.bf16.msra.mxu0 0
        %953 = vmatpush.bf16.msra.mxu0 0
        %954 = vmatpush.bf16.msra.mxu0 0
        %955 = vmatpush.bf16.msra.mxu0 0
        %956 = vmatpush.bf16.msra.mxu0 0
        %957 = vmatpush.bf16.msra.mxu0 0
        %958 = vmatpush.bf16.msra.mxu0 %v949
        %959 = vmatmul.bf16.gmra.mxu0 %v917
        %v960 = vpop.f32.mrf.mxu0
        %v961 = vadd.f32 0.0, %v960
        %v962 = vpop.f32.mrf.mxu0
        %963 = vdwg.mxu0
        %v964 = vld [vmem:[#allocation2 + $0x1] sm:$0x1f]
        %v965 = vadd.f32 %v964, %v961
        %966 = vst.msk [vmem:[#allocation2 + $0x1] sm:$0x1f] %vm938, %v965
      $region60: #{conv_transpose3d_leaky.1} parent=43 // pred_fallthru
        _
      %v967 = vld [vmem:[#allocation2] sm:$0x3f]
      %v968 = vld [vmem:[%s5] sm:$0x1]
      %v970 = vperm.slane %v968, 0
      %v972 = vadd.f32 %v967, %v970
      %vm973 = vcmp.gt.f32.partialorder %v972, 0.0
      %v974 = vmul.f32 %v972, -0.08
      %v975 = vsel %vm973, %v972, %v974
      %976 = vst.msk [vmem:[%s700] sm:$0x3f] %vm702, %v975
      %p977 = scmp.lt.s32.totalorder %s22, 1
      %s978 = scalar_select %p977, %s22, 1
      %p979 = scmp.lt.s32.totalorder %s23, 4
      %s980 = scalar_select %p979, %s23, 4
      %p981 = scmp.lt.s32.totalorder %s24, 6
      %s982 = scalar_select %p981, %s24, 6
      %s983 = smul.addr %s980, 7
      %s984 = sadd.s32 %s982, %s983
      %s985 = smul.addr %s978, 35
      %s986 = sadd.s32 %s984, %s985
      %s987 = smul.addr %s986, 8
      %s988 = scalar_lea.vmem %s6, %s987
      // Predicated region
      $region61: #{conv_transpose3d_leaky.1} parent=43 // pred_check
        %p989 = pneg %p292
      $region62: #{conv_transpose3d_leaky.1} parent=43 // pred_check_branch
        %991 = sbr.rel (%p989) target = $region64
      $region63: #{conv_transpose3d_leaky.1} parent=43 // pred_region
        _
      $region64: #{conv_transpose3d_leaky.1} parent=43 // pred_fallthru
        _
    $region44: #{conv_transpose3d_leaky.1} parent=5 // pred_fallthru
      _
    %p992 = scmp.le.s32.totalorder 2, %s12
    // Predicated region
    $region65: #{conv_transpose3d_leaky.1} parent=5 // pred_check
      %p993 = pneg %p992
    $region66: #{conv_transpose3d_leaky.1} parent=5 // pred_check_branch
      %995 = sbr.rel (%p993) target = $region68
    $region67: #{conv_transpose3d_leaky.1} parent=5 // pred_region
      %s996 = ssub.s32 %s12, 2
      // Predicated region
      $region69: #{conv_transpose3d_leaky.1} parent=67 // pred_check
        %p997 = pneg %p298
      $region70: #{conv_transpose3d_leaky.1} parent=67 // pred_check_branch
        %999 = sbr.rel (%p997) target = $region72
      $region71: #{conv_transpose3d_leaky.1} parent=67 // pred_region
        %p1000 = scmp.lt.s32.totalorder %s25, 1
        %s1001 = scalar_select %p1000, %s25, 1
        %p1002 = scmp.lt.s32.totalorder %s26, 4
        %s1003 = scalar_select %p1002, %s26, 4
        %p1004 = scmp.lt.s32.totalorder %s27, 6
        %s1005 = scalar_select %p1004, %s27, 6
        %s1006 = smul.addr %s1003, 7
        %s1007 = sadd.s32 %s1005, %s1006
        %s1008 = smul.addr %s1001, 35
        %s1009 = sadd.s32 %s1007, %s1008
        %s1010 = smul.addr %s1009, 8
        %s1011 = scalar_lea.vmem %s6, %s1010
      $region72: #{conv_transpose3d_leaky.1} parent=67 // pred_fallthru
        _
    $region68: #{conv_transpose3d_leaky.1} parent=5 // pred_fallthru
      _
  $region6: #{conv_transpose3d_leaky.1} parent=0 // loop_footer
    %s16 = sadd.s32 1, %s12
  $region7: #{conv_transpose3d_leaky.1} parent=0 // loop_footer_branch
    %11 = sbr.rel target = $region3
  $region8: #{conv_transpose3d_leaky.1} parent=0 // loop_exit
    _

</llo_original>
